<compile_context>
chip_gen: v6e
topology: v6e:2x2x1
jax: 0.10.0
libtpu: 0.0.40
codegen_flags: <defaults>
</compile_context>

<pallas_src>
import functools

import jax
import jax.numpy as jnp
from jax.experimental import pallas as pl
from jax.experimental.pallas import tpu as pltpu

LN_EPS = 1e-12                 # BERT layer_norm_eps
NUM_HEADS_OUT = 13 * 4 + 2     # 13 heads x 4 classes, last head x 2 classes
HEADS_PAD = 64                 # lane-friendly padded width for the fused heads


def _vmem_limit_bytes():
    """3/4 of physical VMEM: ~48MiB on v7x, ~96MiB on v5e/v6e (safe headroom)."""
    try:
        cap = getattr(pltpu.get_tpu_info(), "vmem_capacity_bytes", None)
        if cap:
            return int(cap) * 3 // 4
    except Exception:
        pass
    return 48 * 1024 * 1024


VMEM_LIMIT = _vmem_limit_bytes()


def _pick_tile(dim, preferred, align):
    """Largest divisor of `dim` that is <= preferred and a multiple of `align`.

    Never falls back to the full dimension for large ragged dims (which would
    blow VMEM); if no aligned divisor exists, returns the largest divisor
    <= preferred instead.
    """
    if dim <= preferred:
        return dim
    best_unaligned = None
    for t in range(preferred, 0, -1):
        if dim % t == 0:
            if t % align == 0:
                return t
            if best_unaligned is None:
                best_unaligned = t
    return best_unaligned


# --------------------------- shared epilogue helpers -------------------------

def _gelu(y):
    # TODO(synk): HF BERT uses exact erf-GELU; tanh approximation kept for
    # robust TPU lowering (logits differ at ~1e-3 level).
    c = 0.7978845608028654  # sqrt(2/pi)
    return 0.5 * y * (1.0 + jnp.tanh(c * (y + 0.044715 * y * y * y)))


def _layernorm_rows(y, gamma, beta):
    mu = jnp.mean(y, axis=-1, keepdims=True)
    yc = y - mu
    var = jnp.mean(yc * yc, axis=-1, keepdims=True)
    inv = jax.lax.rsqrt(var + LN_EPS)
    return yc * inv * gamma + beta


# --------------------------- tiled dense (+epilogues) ------------------------

def _make_dense_single_kernel(activation):
    # K fits in one step: no accumulator, no init/finalize, no extra VMEM.
    def kernel(x_ref, w_ref, b_ref, o_ref):
        y = jnp.dot(x_ref[...], w_ref[...],
                    preferred_element_type=jnp.float32) + b_ref[...]
        if activation == "gelu":
            y = _gelu(y)
        o_ref[...] = y.astype(o_ref.dtype)
    return kernel


def _make_dense_acc_kernel(activation):
    def kernel(x_ref, w_ref, b_ref, o_ref, acc_ref):
        k = pl.program_id(2)

        @pl.when(k == 0)
        def _init():
            acc_ref[...] = jnp.zeros_like(acc_ref)

        acc_ref[...] += jnp.dot(x_ref[...], w_ref[...],
                                preferred_element_type=jnp.float32)

        @pl.when(k == pl.num_programs(2) - 1)
        def _finalize():
            y = acc_ref[...] + b_ref[...]
            if activation == "gelu":
                y = _gelu(y)
            o_ref[...] = y.astype(o_ref.dtype)
    return kernel


def dense(x, w, b, activation=None, out_dtype=jnp.bfloat16,
          tm=512, tn=1024, tk=768):
    """x: (M,K) bf16, w: (K,N) bf16, b: (N,) f32 -> (M,N) out_dtype."""
    M, K = x.shape
    N = w.shape[1]
    tm = _pick_tile(M, tm, 8)
    tn = _pick_tile(N, tn, 128)
    tk = _pick_tile(K, tk, 128)
    # keep >=2 parallel grid iterations where possible (v7x: 2 TensorCores).
    if (M // tm) * (N // tn) < 2:
        if tm % 16 == 0:
            tm //= 2
        elif tn % 256 == 0:
            tn //= 2
    b2 = b.reshape(1, N)

    if K // tk == 1:
        return pl.pallas_call(
            _make_dense_single_kernel(activation),
            out_shape=jax.ShapeDtypeStruct((M, N), out_dtype),
            grid=(M // tm, N // tn),
            in_specs=[
                pl.BlockSpec((tm, K), lambda i, j: (i, 0)),
                pl.BlockSpec((K, tn), lambda i, j: (0, j)),
                pl.BlockSpec((1, tn), lambda i, j: (0, j)),
            ],
            out_specs=pl.BlockSpec((tm, tn), lambda i, j: (i, j)),
            compiler_params=pltpu.CompilerParams(
                dimension_semantics=("parallel", "parallel"),
                vmem_limit_bytes=VMEM_LIMIT),
        )(x, w, b2)

    return pl.pallas_call(
        _make_dense_acc_kernel(activation),
        out_shape=jax.ShapeDtypeStruct((M, N), out_dtype),
        grid=(M // tm, N // tn, K // tk),
        in_specs=[
            pl.BlockSpec((tm, tk), lambda i, j, k: (i, k)),
            pl.BlockSpec((tk, tn), lambda i, j, k: (k, j)),
            pl.BlockSpec((1, tn), lambda i, j, k: (0, j)),
        ],
        out_specs=pl.BlockSpec((tm, tn), lambda i, j, k: (i, j)),
        scratch_shapes=[pltpu.VMEM((tm, tn), jnp.float32)],
        compiler_params=pltpu.CompilerParams(
            dimension_semantics=("parallel", "parallel", "arbitrary"),
            vmem_limit_bytes=VMEM_LIMIT),
    )(x, w, b2)


def _dense_res_ln_single_kernel(x_ref, w_ref, b_ref, r_ref, g_ref, be_ref, o_ref):
    y = (jnp.dot(x_ref[...], w_ref[...], preferred_element_type=jnp.float32)
         + b_ref[...] + r_ref[...].astype(jnp.float32))
    o_ref[...] = _layernorm_rows(y, g_ref[...], be_ref[...]).astype(o_ref.dtype)


def _dense_res_ln_acc_kernel(x_ref, w_ref, b_ref, r_ref, g_ref, be_ref, o_ref, acc_ref):
    k = pl.program_id(1)

    @pl.when(k == 0)
    def _init():
        acc_ref[...] = jnp.zeros_like(acc_ref)

    acc_ref[...] += jnp.dot(x_ref[...], w_ref[...],
                            preferred_element_type=jnp.float32)

    @pl.when(k == pl.num_programs(1) - 1)
    def _finalize():
        y = acc_ref[...] + b_ref[...] + r_ref[...].astype(jnp.float32)
        o_ref[...] = _layernorm_rows(y, g_ref[...], be_ref[...]).astype(o_ref.dtype)


def dense_residual_layernorm(x, w, b, residual, gamma, beta,
                             out_dtype=jnp.bfloat16, tm=512, tk=768):
    """(x @ w + b + residual) -> LayerNorm, fused. N kept full (LN over lanes)."""
    M, K = x.shape
    N = w.shape[1]
    tm = _pick_tile(M, tm, 8)
    tk = _pick_tile(K, tk, 128)
    if M // tm < 2 and tm % 16 == 0:      # keep both v7x TensorCores busy
        tm //= 2
    args = (x, w, b.reshape(1, N), residual, gamma.reshape(1, N), beta.reshape(1, N))

    if K // tk == 1:
        return pl.pallas_call(
            _dense_res_ln_single_kernel,
            out_shape=jax.ShapeDtypeStruct((M, N), out_dtype),
            grid=(M // tm,),
            in_specs=[
                pl.BlockSpec((tm, K), lambda i: (i, 0)),
                pl.BlockSpec((K, N), lambda i: (0, 0)),
                pl.BlockSpec((1, N), lambda i: (0, 0)),
                pl.BlockSpec((tm, N), lambda i: (i, 0)),
                pl.BlockSpec((1, N), lambda i: (0, 0)),
                pl.BlockSpec((1, N), lambda i: (0, 0)),
            ],
            out_specs=pl.BlockSpec((tm, N), lambda i: (i, 0)),
            compiler_params=pltpu.CompilerParams(
                dimension_semantics=("parallel",),
                vmem_limit_bytes=VMEM_LIMIT),
        )(*args)

    return pl.pallas_call(
        _dense_res_ln_acc_kernel,
        out_shape=jax.ShapeDtypeStruct((M, N), out_dtype),
        grid=(M // tm, K // tk),
        in_specs=[
            pl.BlockSpec((tm, tk), lambda i, k: (i, k)),
            pl.BlockSpec((tk, N), lambda i, k: (k, 0)),
            pl.BlockSpec((1, N), lambda i, k: (0, 0)),
            pl.BlockSpec((tm, N), lambda i, k: (i, 0)),
            pl.BlockSpec((1, N), lambda i, k: (0, 0)),
            pl.BlockSpec((1, N), lambda i, k: (0, 0)),
        ],
        out_specs=pl.BlockSpec((tm, N), lambda i, k: (i, 0)),
        scratch_shapes=[pltpu.VMEM((tm, N), jnp.float32)],
        compiler_params=pltpu.CompilerParams(
            dimension_semantics=("parallel", "arbitrary"),
            vmem_limit_bytes=VMEM_LIMIT),
    )(*args)


# -------------------- fused embeddings (word + pos + type) + LayerNorm -------

def _embed_ln_kernel(w_ref, p_ref, t_ref, g_ref, b_ref, o_ref):
    x = (w_ref[...].astype(jnp.float32)
         + p_ref[...].astype(jnp.float32)
         + t_ref[...].astype(jnp.float32))
    o_ref[...] = _layernorm_rows(x, g_ref[...], b_ref[...]).astype(o_ref.dtype)


def embed_layernorm(word, pos, typ, gamma, beta, seq_len,
                    out_dtype=jnp.bfloat16, tm=512):
    """word: (B*S, H) bf16 gathered embeddings, pos: (S, H), typ: (1, H)."""
    M, H = word.shape
    tm = _pick_tile(seq_len, tm, 8)     # must divide S so the pos map is valid
    blocks_per_seq = seq_len // tm
    return pl.pallas_call(
        _embed_ln_kernel,
        out_shape=jax.ShapeDtypeStruct((M, H), out_dtype),
        grid=(M // tm,),
        in_specs=[
            pl.BlockSpec((tm, H), lambda i: (i, 0)),
            pl.BlockSpec((tm, H), lambda i: (i % blocks_per_seq, 0)),
            pl.BlockSpec((1, H), lambda i: (0, 0)),
            pl.BlockSpec((1, H), lambda i: (0, 0)),
            pl.BlockSpec((1, H), lambda i: (0, 0)),
        ],
        out_specs=pl.BlockSpec((tm, H), lambda i: (i, 0)),
        compiler_params=pltpu.CompilerParams(
            dimension_semantics=("parallel",),
            vmem_limit_bytes=VMEM_LIMIT),
    )(word, pos, typ, gamma.reshape(1, H), beta.reshape(1, H))


# --------------------------- flash-style attention ---------------------------
# Reads Q/K/V blocks directly out of the fused (B*S, 3H) qkv tensor and writes
# the context in merged (B*S, H) layout: no XLA-side slices or head transposes.
# Each block covers g heads with g*head_dim = 128 lanes (lane-dense blocks).

def _heads_per_block(nheads, head_dim):
    for g in range(1, nheads + 1):
        if nheads % g == 0 and (g * head_dim) % 128 == 0:
            return g
    return None


def _flash_attn_kernel(g, dH, q_ref, k_ref, v_ref, neg_ref, o_ref,
                       m_sc, l_sc, acc_sc):
    kv_i = pl.program_id(3)

    @pl.when(kv_i == 0)
    def _init():
        m_sc[...] = jnp.full_like(m_sc, -jnp.inf)
        l_sc[...] = jnp.zeros_like(l_sc)
        acc_sc[...] = jnp.zeros_like(acc_sc)

    neg = neg_ref[0]                       # (1, tkv) additive padding mask
    scale = 1.0 / (dH ** 0.5)

    for h in range(g):                     # static unroll over heads in block
        q = q_ref[:, h * dH:(h + 1) * dH]  # (tq, dH)  bf16
        k = k_ref[:, h * dH:(h + 1) * dH]  # (tkv, dH) bf16
        v = v_ref[:, h * dH:(h + 1) * dH]  # (tkv, dH) bf16

        s = jax.lax.dot_general(q, k, (((1,), (1,)), ((), ())),
                                preferred_element_type=jnp.float32) * scale
        s = s + neg

        m_prev = m_sc[h]                   # (tq, 1)
        m_new = jnp.maximum(m_prev, jnp.max(s, axis=-1, keepdims=True))
        alpha = jnp.exp(m_prev - m_new)
        p = jnp.exp(s - m_new)
        l_sc[h] = alpha * l_sc[h] + jnp.sum(p, axis=-1, keepdims=True)
        acc_sc[h] = alpha * acc_sc[h] + jnp.dot(p.astype(v.dtype), v,
                                                preferred_element_type=jnp.float32)
        m_sc[h] = m_new

    @pl.when(kv_i == pl.num_programs(3) - 1)
    def _finalize():
        for h in range(g):
            # exact reciprocal: epilogue only, keeps normalization bit-accurate
            o_ref[:, h * dH:(h + 1) * dH] = (acc_sc[h] / l_sc[h]).astype(o_ref.dtype)


def flash_attention(qkv, neg_mask, batch, seq, hidden, nheads, tq=512, tkv=512):
    """qkv: (B*S, 3H) bf16 fused projections; neg_mask: (B, 1, S) f32.

    Returns the attention context in merged (B*S, H) layout.
    """
    dH = hidden // nheads
    g = _heads_per_block(nheads, dH)
    # TODO(synk): fall back to a padded-head path if head_dim can't tile to 128 lanes.
    assert g is not None, "head_dim must allow a 128-lane head group"
    gw = g * dH
    hg_blocks = nheads // g
    tq = _pick_tile(seq, tq, 8)
    tkv = _pick_tile(seq, tkv, 8)
    nq, nk = seq // tq, seq // tkv
    qcols = hidden // gw                   # column-blocks occupied by Q portion

    kernel = functools.partial(_flash_attn_kernel, g, dH)
    return pl.pallas_call(
        kernel,
        out_shape=jax.ShapeDtypeStruct((batch * seq, hidden), qkv.dtype),
        grid=(batch, hg_blocks, nq, nk),
        in_specs=[
            pl.BlockSpec((tq, gw), lambda b, hg, qi, ki: (b * nq + qi, hg)),
            pl.BlockSpec((tkv, gw), lambda b, hg, qi, ki: (b * nk + ki, qcols + hg)),
            pl.BlockSpec((tkv, gw), lambda b, hg, qi, ki: (b * nk + ki, 2 * qcols + hg)),
            # per-batch padding mask broadcast over heads/q-tiles via index map
            pl.BlockSpec((1, 1, tkv), lambda b, hg, qi, ki: (b, 0, ki)),
        ],
        out_specs=pl.BlockSpec((tq, gw), lambda b, hg, qi, ki: (b * nq + qi, hg)),
        scratch_shapes=[
            pltpu.VMEM((g, tq, 1), jnp.float32),    # running max (per head)
            pltpu.VMEM((g, tq, 1), jnp.float32),    # running denom
            pltpu.VMEM((g, tq, dH), jnp.float32),   # running numerator
        ],
        compiler_params=pltpu.CompilerParams(
            dimension_semantics=("parallel", "parallel", "parallel", "arbitrary"),
            vmem_limit_bytes=VMEM_LIMIT),
    )(qkv, qkv, qkv, neg_mask)


# ------------------------- parameters (synthetic) ----------------------------

def init_params(key, vocab, max_pos, H, nlayers, nheads, inter):
    keys = jax.random.split(key, 4 + nlayers)

    def n(k, shape, scale=0.02):
        return jax.random.normal(k, shape, dtype=jnp.float32) * scale

    params = {
        'num_heads': nheads,
        'word_emb': n(keys[0], (vocab, H)),
        'pos_emb': n(keys[1], (max_pos, H)),
        'type_emb': n(keys[2], (2, H)),
        'emb_ln_g': jnp.ones((H,), jnp.float32),
        'emb_ln_b': jnp.zeros((H,), jnp.float32),
        # all 14 linear heads concatenated along output dim: 13*4 + 2 = 54
        'heads_w': n(keys[3], (H, NUM_HEADS_OUT)),
        'heads_b': jnp.zeros((NUM_HEADS_OUT,), jnp.float32),
        'layers': [],
    }
    for li in range(nlayers):
        lk = jax.random.split(keys[4 + li], 6)
        params['layers'].append({
            'wq': n(lk[0], (H, H)), 'bq': jnp.zeros((H,), jnp.float32),
            'wk': n(lk[1], (H, H)), 'bk': jnp.zeros((H,), jnp.float32),
            'wv': n(lk[2], (H, H)), 'bv': jnp.zeros((H,), jnp.float32),
            'wo': n(lk[3], (H, H)), 'bo': jnp.zeros((H,), jnp.float32),
            'ln1_g': jnp.ones((H,), jnp.float32), 'ln1_b': jnp.zeros((H,), jnp.float32),
            'wi': n(lk[4], (H, inter)), 'bi': jnp.zeros((inter,), jnp.float32),
            'wo2': n(lk[5], (inter, H)), 'bo2': jnp.zeros((H,), jnp.float32),
            'ln2_g': jnp.ones((H,), jnp.float32), 'ln2_b': jnp.zeros((H,), jnp.float32),
        })
    return params


def prepare_params(params):
    """One-time prep: fuse QKV, cast matmul weights / word table to bf16,
    pad classifier heads to 64 lane-dense output columns."""
    bf = lambda a: a.astype(jnp.bfloat16)
    pad = HEADS_PAD - NUM_HEADS_OUT
    p = {
        'num_heads': params['num_heads'],
        'word_emb_bf16': bf(params['word_emb']),
        'pos_emb': params['pos_emb'],
        'type_emb': params['type_emb'],
        'emb_ln_g': params['emb_ln_g'],
        'emb_ln_b': params['emb_ln_b'],
        'heads_w_pad': bf(jnp.pad(params['heads_w'], ((0, 0), (0, pad)))),
        'heads_b_pad': jnp.pad(params['heads_b'], (0, pad)),
        'layers': [],
    }
    # TODO(synk): on v7x, FFN weights (wi, wo2) could be stored fp8 with
    # per-channel scales for ~2x MXU throughput once logit tolerance is validated.
    for layer in params['layers']:
        p['layers'].append({
            'wqkv': bf(jnp.concatenate([layer['wq'], layer['wk'], layer['wv']], axis=1)),
            'bqkv': jnp.concatenate([layer['bq'], layer['bk'], layer['bv']]),
            'wo': bf(layer['wo']), 'bo': layer['bo'],
            'ln1_g': layer['ln1_g'], 'ln1_b': layer['ln1_b'],
            'wi': bf(layer['wi']), 'bi': layer['bi'],
            'wo2': bf(layer['wo2']), 'bo2': layer['bo2'],
            'ln2_g': layer['ln2_g'], 'ln2_b': layer['ln2_b'],
        })
    return p


# ----------------------------- forward pass ----------------------------------

def bert_labeler_forward(params, source_padded, attention_mask):
    """Mirrors BertLabeler.forward.

    source_padded:   (B, S) int32 token ids
    attention_mask:  (B, S) {0,1}
    returns: list of 14 arrays; first 13 are (B, 4), last is (B, 2)
    """
    B, S = source_padded.shape
    H = params['pos_emb'].shape[1]
    nheads = params['num_heads']

    # --- embeddings: table gather in XLA (glue), sum + LayerNorm fused kernel ---
    # TODO(synk): token_type hard-coded to 0 (labeler is always single-segment).
    word = params['word_emb_bf16'][source_padded].reshape(B * S, H)
    x = embed_layernorm(word, params['pos_emb'][:S], params['type_emb'][0:1],
                        params['emb_ln_g'], params['emb_ln_b'], S)   # (B*S, H) bf16

    # additive padding mask, kept at (B, 1, S) -- broadcast inside attention
    neg = ((1.0 - attention_mask.astype(jnp.float32)) * -1e9).reshape(B, 1, S)

    for layer in params['layers']:
        # fused QKV projection -> flash attention straight from the fused tensor
        qkv = dense(x, layer['wqkv'], layer['bqkv'])                    # (B*S, 3H)
        ctx = flash_attention(qkv, neg, B, S, H, nheads)                # (B*S, H)
        x = dense_residual_layernorm(ctx, layer['wo'], layer['bo'],
                                     x, layer['ln1_g'], layer['ln1_b'])
        # feed forward: GELU fused in matmul epilogue, residual+LN fused into wo2
        h = dense(x, layer['wi'], layer['bi'], activation="gelu")       # (B*S, inter)
        x = dense_residual_layernorm(h, layer['wo2'], layer['bo2'],
                                     x, layer['ln2_g'], layer['ln2_b'])

    # CLS rows (token 0 of every sequence); dropout is identity at inference.
    # TODO(synk): could be a B-row DMA gather via a pl.Element index map.
    cls_hidden = x[::S]                                                  # (B, H)

    logits = dense(cls_hidden, params['heads_w_pad'], params['heads_b_pad'],
                   out_dtype=jnp.float32)                                # (B, 64) f32
    out = [logits[:, i * 4:(i + 1) * 4] for i in range(13)]
    out.append(logits[:, 52:54])
    return out


# --------------------------------- main ---------------------------------------

if __name__ == "__main__":
    key = jax.random.PRNGKey(0)
    kp, ki = jax.random.split(key)

    # small synthetic BERT config (real bert-base: H=768, 12 layers, 12 heads,
    # head_dim=64 -> 2 heads per attention block); here head_dim is also 64 so
    # the 128-lane head grouping and the multi-k FFN-out path are exercised.
    B, S = 2, 16
    H, nheads, nlayers, inter = 256, 4, 2, 1024
    vocab, max_pos = 64, 32

    raw_params = init_params(kp, vocab, max_pos, H, nlayers, nheads, inter)
    params = prepare_params(raw_params)

    source_padded = jax.random.randint(ki, (B, S), 0, vocab, dtype=jnp.int32)
    attention_mask = jnp.ones((B, S), dtype=jnp.int32).at[:, 12:].set(0)  # last 4 pad

    out = bert_labeler_forward(params, source_padded, attention_mask)
    out = jax.block_until_ready(out)

    assert len(out) == 14
    assert all(o.shape == (B, 4) for o in out[:13])
    assert out[13].shape == (B, 2)
    assert all(bool(jnp.all(jnp.isfinite(o))) for o in out)
    print("KERNEL_OK")
</pallas_src>

<mosaic_0001>
module attributes {stable_mosaic.version = 11 : i64} {
  func.func @_embed_ln_kernel(%arg0: i32, %arg1: memref<16x256xbf16, #tpu.memory_space<vmem>>, %arg2: memref<16x256xf32, #tpu.memory_space<vmem>>, %arg3: memref<1x256xf32, #tpu.memory_space<vmem>>, %arg4: memref<1x256xf32, #tpu.memory_space<vmem>>, %arg5: memref<1x256xf32, #tpu.memory_space<vmem>>, %arg6: memref<16x256xbf16, #tpu.memory_space<vmem>>) attributes {dimension_semantics = [#tpu.dimension_semantics<parallel>], iteration_bounds = array<i64: 2>, scalar_prefetch = 0 : i64, scratch_operands = 0 : i64, tpu.core_type = #tpu.core_type<tc>, window_params = [{transform_indices = @transform_0, window_bounds = array<i64: 16, 256>}, {transform_indices = @transform_1, window_bounds = array<i64: 16, 256>}, {pipeline_mode = #tpu.pipeline_mode<synchronous>, transform_indices = @transform_2, window_bounds = array<i64: 1, 256>}, {pipeline_mode = #tpu.pipeline_mode<synchronous>, transform_indices = @transform_3, window_bounds = array<i64: 1, 256>}, {pipeline_mode = #tpu.pipeline_mode<synchronous>, transform_indices = @transform_4, window_bounds = array<i64: 1, 256>}, {transform_indices = @transform_5, window_bounds = array<i64: 16, 256>}]} {
    %c0 = arith.constant 0 : index
    %c0_0 = arith.constant 0 : index
    %0 = vector.load %arg1[%c0, %c0_0] : memref<16x256xbf16, #tpu.memory_space<vmem>>, vector<16x256xbf16>
    %1 = arith.extf %0 : vector<16x256xbf16> to vector<16x256xf32>
    %c0_1 = arith.constant 0 : index
    %c0_2 = arith.constant 0 : index
    %2 = vector.load %arg2[%c0_1, %c0_2] : memref<16x256xf32, #tpu.memory_space<vmem>>, vector<16x256xf32>
    %3 = arith.addf %1, %2 : vector<16x256xf32>
    %c0_3 = arith.constant 0 : index
    %c0_4 = arith.constant 0 : index
    %4 = vector.load %arg3[%c0_3, %c0_4] : memref<1x256xf32, #tpu.memory_space<vmem>>, vector<1x256xf32>
    %5 = vector.broadcast %4 : vector<1x256xf32> to vector<16x256xf32>
    %6 = arith.addf %3, %5 : vector<16x256xf32>
    %c0_5 = arith.constant 0 : index
    %c0_6 = arith.constant 0 : index
    %7 = vector.load %arg4[%c0_5, %c0_6] : memref<1x256xf32, #tpu.memory_space<vmem>>, vector<1x256xf32>
    %c0_7 = arith.constant 0 : index
    %c0_8 = arith.constant 0 : index
    %8 = vector.load %arg5[%c0_7, %c0_8] : memref<1x256xf32, #tpu.memory_space<vmem>>, vector<1x256xf32>
    %cst = arith.constant dense<0.000000e+00> : vector<16xf32>
    %9 = vector.multi_reduction <add>, %6, %cst [1] : vector<16x256xf32> to vector<16xf32>
    %10 = vector.shape_cast %9 : vector<16xf32> to vector<16x1xf32>
    %cst_9 = arith.constant 2.560000e+02 : f32
    %11 = vector.broadcast %cst_9 : f32 to vector<16x1xf32>
    %12 = arith.divf %10, %11 : vector<16x1xf32>
    %13 = vector.broadcast %12 : vector<16x1xf32> to vector<16x256xf32>
    %14 = arith.subf %6, %13 : vector<16x256xf32>
    %15 = arith.mulf %14, %14 : vector<16x256xf32>
    %cst_10 = arith.constant dense<0.000000e+00> : vector<16xf32>
    %16 = vector.multi_reduction <add>, %15, %cst_10 [1] : vector<16x256xf32> to vector<16xf32>
    %17 = vector.shape_cast %16 : vector<16xf32> to vector<16x1xf32>
    %cst_11 = arith.constant 2.560000e+02 : f32
    %18 = vector.broadcast %cst_11 : f32 to vector<16x1xf32>
    %19 = arith.divf %17, %18 : vector<16x1xf32>
    %cst_12 = arith.constant 9.99999996E-13 : f32
    %20 = vector.broadcast %cst_12 : f32 to vector<16x1xf32>
    %21 = arith.addf %19, %20 : vector<16x1xf32>
    %22 = math.rsqrt %21 : vector<16x1xf32>
    %23 = vector.broadcast %22 : vector<16x1xf32> to vector<16x256xf32>
    %24 = arith.mulf %14, %23 : vector<16x256xf32>
    %25 = vector.broadcast %7 : vector<1x256xf32> to vector<16x256xf32>
    %26 = arith.mulf %24, %25 : vector<16x256xf32>
    %27 = vector.broadcast %8 : vector<1x256xf32> to vector<16x256xf32>
    %28 = arith.addf %26, %27 : vector<16x256xf32>
    %29 = arith.truncf %28 : vector<16x256xf32> to vector<16x256xbf16>
    %c0_13 = arith.constant 0 : index
    %c0_14 = arith.constant 0 : index
    %30 = vector.load %arg6[%c0_13, %c0_14] : memref<16x256xbf16, #tpu.memory_space<vmem>>, vector<16x256xbf16>
    tpu.vector_store %arg6[%c0_13, %c0_14], %29 {strides = array<i32>} : memref<16x256xbf16, #tpu.memory_space<vmem>>, vector<16x256xbf16>,
    return
  }
  func.func @transform_0(%arg0: i32) -> (i32, i32) {
    %c0_i32 = arith.constant 0 : i32
    %c0_i32_0 = arith.constant 0 : i32
    return %arg0, %c0_i32 : i32, i32
  }
  func.func @transform_1(%arg0: i32) -> (i32, i32) {
    %c1_i32 = arith.constant 1 : i32
    %c0_i32 = arith.constant 0 : i32
    %0 = arith.cmpi eq, %c1_i32, %c0_i32 : i32
    %c1_i32_0 = arith.constant 1 : i32
    %1 = arith.select %0, %c1_i32_0, %c1_i32 : i32
    %2 = arith.remsi %arg0, %1 : i32
    %c0_i32_1 = arith.constant 0 : i32
    %3 = arith.cmpi ne, %2, %c0_i32_1 : i32
    %c0_i32_2 = arith.constant 0 : i32
    %4 = arith.cmpi slt, %2, %c0_i32_2 : i32
    %c0_i32_3 = arith.constant 0 : i32
    %5 = arith.cmpi slt, %1, %c0_i32_3 : i32
    %6 = arith.xori %4, %5 : i1
    %7 = arith.andi %6, %3 : i1
    %8 = arith.addi %2, %1 : i32
    %9 = arith.select %7, %8, %2 : i32
    %c0_i32_4 = arith.constant 0 : i32
    %c0_i32_5 = arith.constant 0 : i32
    return %9, %c0_i32_4 : i32, i32
  }
  func.func @transform_2(%arg0: i32) -> (i32, i32) {
    %c0_i32 = arith.constant 0 : i32
    %c0_i32_0 = arith.constant 0 : i32
    %c0_i32_1 = arith.constant 0 : i32
    return %c0_i32, %c0_i32_0 : i32, i32
  }
  func.func @transform_3(%arg0: i32) -> (i32, i32) {
    %c0_i32 = arith.constant 0 : i32
    %c0_i32_0 = arith.constant 0 : i32
    %c0_i32_1 = arith.constant 0 : i32
    return %c0_i32, %c0_i32_0 : i32, i32
  }
  func.func @transform_4(%arg0: i32) -> (i32, i32) {
    %c0_i32 = arith.constant 0 : i32
    %c0_i32_0 = arith.constant 0 : i32
    %c0_i32_1 = arith.constant 0 : i32
    return %c0_i32, %c0_i32_0 : i32, i32
  }
  func.func @transform_5(%arg0: i32) -> (i32, i32) {
    %c0_i32 = arith.constant 0 : i32
    %c0_i32_0 = arith.constant 0 : i32
    return %arg0, %c0_i32 : i32, i32
  }
}

</mosaic_0001>

<llo_original>
// kernel: tpu_custom_call.1
$region0: #{tpu_custom_call.1}
  #allocation0 [shape = 'u32[]', space=smem, size = 0x4, offset = 0x4, fixed_abs, tag = 'smem constant byte address 0x4 - core index']
  #allocation1 [shape = 'u32[144,128]{1,0:T(1,128)}', space=vmem, size = 0x12000, scoped, tag = 'internal scratch']
  %s0 = inlined_call_operand.hbm [shape: bf16[32,256], index: 0, kind: input, shape index: {}]
  %s1 = inlined_call_operand.hbm [shape: f32[16,256], index: 1, kind: input, shape index: {}]
  %s2 = inlined_call_operand.vmem [shape: f32[1,256], index: 2, kind: input, shape index: {}]
  %s3 = inlined_call_operand.vmem [shape: f32[1,256], index: 3, kind: input, shape index: {}]
  %s4 = inlined_call_operand.vmem [shape: f32[1,256], index: 4, kind: input, shape index: {}]
  %s5 = inlined_call_operand.hbm [shape: bf16[32,256], index: 5, kind: output, shape index: {}]
  %s6 = sld [smem:[#allocation0]]
  $region61: #{tpu_custom_call.1} parent=0
    _
  %s8 = ssub.s32 1, %s6
  %s9 = scalar_select 0, %s8, %s6
  $region1: #{tpu_custom_call.1} parent=0
    #allocation2 [shape = 'u8[16384]{0}', space=vmem, size = 0x4000, scoped, tag = 'input window, operand 0']
    #allocation3 [shape = 's32[2]{0}', space=sflag, size = 0x8, scoped, tag = 'scoped memory for tpu_custom_call.1']
    #allocation4 [shape = 's32[2]{0}', space=sflag, size = 0x8, scoped, tag = 'scoped memory for tpu_custom_call.1']
    #allocation5 [shape = 'u8[16384]{0}', space=vmem, size = 0x4000, scoped, tag = 'input window, operand 1, single buffered']
    #allocation6 [shape = 's32[1]{0}', space=sflag, size = 0x4, scoped, tag = 'scoped memory for tpu_custom_call.1']
    #allocation7 [shape = 'u8[16384]{0}', space=vmem, size = 0x4000, scoped, tag = 'output window, operand 0']
    %10 = vsyncpa [#allocation3], 0
    %s11 = scalar_lea.sflag [#allocation3], 1
    %12 = vsyncpa %s11, 0
    %13 = vsyncpa [#allocation6], 0
    %14 = vsyncpa [#allocation4], 0
    %s15 = scalar_lea.sflag [#allocation4], 1
    %16 = vsyncpa %s15, 0
    loop: start=0, step=1, limit=4
    $region2: #{tpu_custom_call.1} parent=1 // loop_pre_header
      _
    $region3: #{tpu_custom_call.1} parent=1 // loop_header
      %s18 = sphi 0, %s22
      %p19 = scmp.ge.s32.totalorder %s18, 4
      %s28 = sphi 0, %s30
      %s31 = sphi 0, %s28
      %s32 = sphi 0, %s31
      %s48 = sphi 0, %s32
      %s52 = sphi 0, %s52
      %s54 = sphi 0, %s52
      %s55 = sphi 0, %s54
      %s69 = sphi 0, %s55
      %s73 = sphi 0, %s73
      %s75 = sphi 0, %s73
      %s76 = sphi 0, %s75
      %s90 = sphi 0, %s76
      %s94 = sphi 0, %s94
      %s96 = sphi 0, %s94
      %s97 = sphi 0, %s96
      %s111 = sphi 0, %s97
      %s115 = sphi 0, %s115
      %s117 = sphi 0, %s115
      %s118 = sphi 0, %s117
      %s132 = sphi 0, %s118
      %s138 = sphi 0, %s140
      %s141 = sphi 0, %s138
      %s142 = sphi 0, %s141
      %s158 = sphi 0, %s142
    $region4: #{tpu_custom_call.1} parent=1 // loop_header_branch
      %21 = sbr.rel (%p19) target = $region8
    $region5: #{tpu_custom_call.1} parent=1 // loop_body
      %s23 = ssub.s32 %s18, 1
      %s24 = ssub.s32 %s18, 2
      %s25 = sadd.s32 %s18, 1
      %s26 = ssub.s32 %s18, %s25
      %p27 = scmp.eq.s32.totalorder %s26, 0
      %s29 = sadd.s32 %s28, 1
      %s30 = scalar_select %p27, %s28, %s29
      %p33 = pneg %p27
      %p34 = scmp.eq.s32.totalorder %s18, 1
      %p35 = por %p33, %p34
      %p36 = scmp.ne.s32.totalorder %s28, %s31
      %p37 = scmp.eq.s32.totalorder %s18, 0
      %p38 = por %p36, %p37
      %p39 = scmp.ne.s32.totalorder %s28, %s31
      %p40 = scmp.eq.s32.totalorder %s23, 1
      %p41 = por %p39, %p40
      %p42 = scmp.ne.s32.totalorder %s31, %s32
      %p43 = scmp.eq.s32.totalorder %s23, 0
      %p44 = por %p42, %p43
      %p45 = scmp.ne.s32.totalorder %s31, %s32
      %p46 = scmp.eq.s32.totalorder %s24, 1
      %p47 = por %p45, %p46
      %p49 = scmp.ne.s32.totalorder %s32, %s48
      %p50 = scmp.eq.s32.totalorder %s24, 0
      %p51 = por %p49, %p50
      %s53 = sadd.s32 %s52, 1
      %p56 = scmp.eq.s32.totalorder %s18, 1
      %p57 = scmp.ne.s32.totalorder %s52, %s54
      %p58 = scmp.eq.s32.totalorder %s18, 0
      %p59 = por %p57, %p58
      %p60 = scmp.ne.s32.totalorder %s52, %s54
      %p61 = scmp.eq.s32.totalorder %s23, 1
      %p62 = por %p60, %p61
      %p63 = scmp.ne.s32.totalorder %s54, %s55
      %p64 = scmp.eq.s32.totalorder %s23, 0
      %p65 = por %p63, %p64
      %p66 = scmp.ne.s32.totalorder %s54, %s55
      %p67 = scmp.eq.s32.totalorder %s24, 1
      %p68 = por %p66, %p67
      %p70 = scmp.ne.s32.totalorder %s55, %s69
      %p71 = scmp.eq.s32.totalorder %s24, 0
      %p72 = por %p70, %p71
      %s74 = sadd.s32 %s73, 1
      %p77 = scmp.eq.s32.totalorder %s18, 1
      %p78 = scmp.ne.s32.totalorder %s73, %s75
      %p79 = scmp.eq.s32.totalorder %s18, 0
      %p80 = por %p78, %p79
      %p81 = scmp.ne.s32.totalorder %s73, %s75
      %p82 = scmp.eq.s32.totalorder %s23, 1
      %p83 = por %p81, %p82
      %p84 = scmp.ne.s32.totalorder %s75, %s76
      %p85 = scmp.eq.s32.totalorder %s23, 0
      %p86 = por %p84, %p85
      %p87 = scmp.ne.s32.totalorder %s75, %s76
      %p88 = scmp.eq.s32.totalorder %s24, 1
      %p89 = por %p87, %p88
      %p91 = scmp.ne.s32.totalorder %s76, %s90
      %p92 = scmp.eq.s32.totalorder %s24, 0
      %p93 = por %p91, %p92
      %s95 = sadd.s32 %s94, 1
      %p98 = scmp.eq.s32.totalorder %s18, 1
      %p99 = scmp.ne.s32.totalorder %s94, %s96
      %p100 = scmp.eq.s32.totalorder %s18, 0
      %p101 = por %p99, %p100
      %p102 = scmp.ne.s32.totalorder %s94, %s96
      %p103 = scmp.eq.s32.totalorder %s23, 1
      %p104 = por %p102, %p103
      %p105 = scmp.ne.s32.totalorder %s96, %s97
      %p106 = scmp.eq.s32.totalorder %s23, 0
      %p107 = por %p105, %p106
      %p108 = scmp.ne.s32.totalorder %s96, %s97
      %p109 = scmp.eq.s32.totalorder %s24, 1
      %p110 = por %p108, %p109
      %p112 = scmp.ne.s32.totalorder %s97, %s111
      %p113 = scmp.eq.s32.totalorder %s24, 0
      %p114 = por %p112, %p113
      %s116 = sadd.s32 %s115, 1
      %p119 = scmp.eq.s32.totalorder %s18, 1
      %p120 = scmp.ne.s32.totalorder %s115, %s117
      %p121 = scmp.eq.s32.totalorder %s18, 0
      %p122 = por %p120, %p121
      %p123 = scmp.ne.s32.totalorder %s115, %s117
      %p124 = scmp.eq.s32.totalorder %s23, 1
      %p125 = por %p123, %p124
      %p126 = scmp.ne.s32.totalorder %s117, %s118
      %p127 = scmp.eq.s32.totalorder %s23, 0
      %p128 = por %p126, %p127
      %p129 = scmp.ne.s32.totalorder %s117, %s118
      %p130 = scmp.eq.s32.totalorder %s24, 1
      %p131 = por %p129, %p130
      %p133 = scmp.ne.s32.totalorder %s118, %s132
      %p134 = scmp.eq.s32.totalorder %s24, 0
      %p135 = por %p133, %p134
      %s136 = ssub.s32 %s18, %s25
      %p137 = scmp.eq.s32.totalorder %s136, 0
      %s139 = sadd.s32 %s138, 1
      %s140 = scalar_select %p137, %s138, %s139
      %p143 = pneg %p137
      %p144 = scmp.eq.s32.totalorder %s18, 1
      %p145 = por %p143, %p144
      %p146 = scmp.ne.s32.totalorder %s138, %s141
      %p147 = scmp.eq.s32.totalorder %s18, 0
      %p148 = por %p146, %p147
      %p149 = scmp.ne.s32.totalorder %s138, %s141
      %p150 = scmp.eq.s32.totalorder %s23, 1
      %p151 = por %p149, %p150
      %p152 = scmp.ne.s32.totalorder %s141, %s142
      %p153 = scmp.eq.s32.totalorder %s23, 0
      %p154 = por %p152, %p153
      %p155 = scmp.ne.s32.totalorder %s141, %s142
      %p156 = scmp.eq.s32.totalorder %s24, 1
      %p157 = por %p155, %p156
      %p159 = scmp.ne.s32.totalorder %s142, %s158
      %p160 = scmp.eq.s32.totalorder %s24, 0
      %p161 = por %p159, %p160
      %p162 = scmp.le.s32.totalorder 1, %s18
      %p163 = scmp.lt.s32.totalorder %s18, 3
      %p164 = pnand %p162, %p163
      %p165 = pneg %p164
      // Predicated region
      $region9: #{tpu_custom_call.1} parent=5 // pred_check
        _
      $region10: #{tpu_custom_call.1} parent=5 // pred_check_branch
        %167 = sbr.rel (%p164) target = $region12
      $region11: #{tpu_custom_call.1} parent=5 // pred_region
        %s168 = ssub.s32 %s18, 1
        // Predicated region
        $region13: #{tpu_custom_call.1} parent=11 // pred_check
          %p169 = pneg %p65
        $region14: #{tpu_custom_call.1} parent=11 // pred_check_branch
          %171 = sbr.rel (%p169) target = $region16
        $region15: #{tpu_custom_call.1} parent=11 // pred_region
          %s173 = ssub.s32 512, 512
          %174 = vsyncadd [#allocation6], %s173
          %s175 = sshll.u32 [#allocation5], 4
          %s176 = int_to_ptr.vmem [resolvable:$true] %s175
          %181 = dma.hbm_to_vmem [thread:$0]  %s1, 512, %s176, [#allocation6], 256, 256, 16
        $region16: #{tpu_custom_call.1} parent=11 // pred_fallthru
          _
        // Predicated region
        $region17: #{tpu_custom_call.1} parent=11 // pred_check
          %p182 = pneg %p86
        $region18: #{tpu_custom_call.1} parent=11 // pred_check_branch
          %184 = sbr.rel (%p182) target = $region20
        $region19: #{tpu_custom_call.1} parent=11 // pred_region
          _
        $region20: #{tpu_custom_call.1} parent=11 // pred_fallthru
          _
        // Predicated region
        $region21: #{tpu_custom_call.1} parent=11 // pred_check
          %p185 = pneg %p107
        $region22: #{tpu_custom_call.1} parent=11 // pred_check_branch
          %187 = sbr.rel (%p185) target = $region24
        $region23: #{tpu_custom_call.1} parent=11 // pred_region
          _
        $region24: #{tpu_custom_call.1} parent=11 // pred_fallthru
          _
        // Predicated region
        $region25: #{tpu_custom_call.1} parent=11 // pred_check
          %p188 = pneg %p128
        $region26: #{tpu_custom_call.1} parent=11 // pred_check_branch
          %190 = sbr.rel (%p188) target = $region28
        $region27: #{tpu_custom_call.1} parent=11 // pred_region
          _
        $region28: #{tpu_custom_call.1} parent=11 // pred_fallthru
          _
      $region12: #{tpu_custom_call.1} parent=5 // pred_fallthru
        _
      %p191 = scmp.lt.s32.totalorder %s18, 2
      // Predicated region
      $region29: #{tpu_custom_call.1} parent=5 // pred_check
        %p192 = pneg %p191
      $region30: #{tpu_custom_call.1} parent=5 // pred_check_branch
        %194 = sbr.rel (%p192) target = $region32
      $region31: #{tpu_custom_call.1} parent=5 // pred_region
        // Predicated region
        $region33: #{tpu_custom_call.1} parent=31 // pred_check
          %p195 = pneg %p38
        $region34: #{tpu_custom_call.1} parent=31 // pred_check_branch
          %197 = sbr.rel (%p195) target = $region36
        $region35: #{tpu_custom_call.1} parent=31 // pred_region
          %s198 = sand.u32 %s28, 1
          %s199 = scalar_lea.sflag [#allocation3], %s198
          %s200 = sand.u32 %s28, 1
          %s201 = smul.addr %s200, 16
          %s202 = scalar_lea.vmem [#allocation2], %s201
          %s203 = smul.u32 2, %s18
          %s205 = ssub.s32 256, 256
          %206 = vsyncadd %s199, %s205
          %s207 = smul.addr %s203, 2
          %s208 = smul.addr %s207, 64
          %s209 = scalar_lea.hbm %s0, %s208
          %s210 = sshll.u32 %s202, 4
          %s211 = int_to_ptr.vmem [resolvable:$true] %s210
          %216 = dma.hbm_to_vmem [thread:$0]  %s209, 256, %s211, %s199, 128, 128, 8
        $region36: #{tpu_custom_call.1} parent=31 // pred_fallthru
          _
      $region32: #{tpu_custom_call.1} parent=5 // pred_fallthru
        _
      %p217 = scmp.le.s32.totalorder 1, %s18
      %p218 = scmp.lt.s32.totalorder %s18, 3
      %p219 = pnand %p217, %p218
      %p220 = pneg %p219
      // Predicated region
      $region37: #{tpu_custom_call.1} parent=5 // pred_check
        _
      $region38: #{tpu_custom_call.1} parent=5 // pred_check_branch
        %222 = sbr.rel (%p219) target = $region40
      $region39: #{tpu_custom_call.1} parent=5 // pred_region
        %s223 = ssub.s32 %s18, 1
        %s224 = sand.u32 %s31, 1
        %s225 = scalar_lea.sflag [#allocation3], %s224
        %s226 = sand.u32 %s31, 1
        %s227 = smul.addr %s226, 16
        %s228 = scalar_lea.vmem [#allocation2], %s227
        // Predicated region
        $region41: #{tpu_custom_call.1} parent=39 // pred_check
          %p229 = pneg %p44
        $region42: #{tpu_custom_call.1} parent=39 // pred_check_branch
          %231 = sbr.rel (%p229) target = $region44
        $region43: #{tpu_custom_call.1} parent=39 // pred_region
          %232 = dma.done %s225, 256
        $region44: #{tpu_custom_call.1} parent=39 // pred_fallthru
          _
        // Predicated region
        $region45: #{tpu_custom_call.1} parent=39 // pred_check
          %p233 = pneg %p65
        $region46: #{tpu_custom_call.1} parent=39 // pred_check_branch
          %235 = sbr.rel (%p233) target = $region48
        $region47: #{tpu_custom_call.1} parent=39 // pred_region
          %236 = dma.done [#allocation6], 512
        $region48: #{tpu_custom_call.1} parent=39 // pred_fallthru
          _
        %s237 = sand.u32 %s31, 1
        %s238 = scalar_lea.sflag [#allocation3], %s237
        %s239 = sand.u32 %s31, 1
        %s240 = smul.addr %s239, 16
        %s241 = scalar_lea.vmem [#allocation2], %s240
        %p242 = pneg %p44
        %p243 = pneg %p41
        %p244 = pneg %p65
        %p245 = pneg %p62
        %p246 = pneg %p86
        %p247 = pneg %p83
        %p248 = pneg %p107
        %p249 = pneg %p104
        %p250 = pneg %p128
        %p251 = pneg %p125
        %p252 = pneg %p154
        %p253 = pneg %p151
        %s254 = sand.u32 %s141, 1
        %s255 = scalar_lea.sflag [#allocation4], %s254
        %s256 = sand.u32 %s141, 1
        %s257 = smul.addr %s256, 16
        %s258 = scalar_lea.vmem [#allocation7], %s257
        %s259 = smul.u32 2, %s23
        %s260 = smul.u32 2, %s23
        %v261 = vld [vmem:[%s228] sm:$0xff]
        %v262 = vld [vmem:[%s228 + $0x8] sm:$0xff]
        %v263 = vunpack.c.l.bf16 %v261
        %v264 = vunpack.c.h.bf16 %v261
        %v265 = vunpack.c.l.bf16 %v262
        %v266 = vunpack.c.h.bf16 %v262
        %v267 = vld [vmem:[#allocation5] sm:$0xff]
        %v268 = vld [vmem:[#allocation5 + $0x8] sm:$0xff]
        %v269 = vld [vmem:[#allocation5 + $0x10] sm:$0xff]
        %v270 = vld [vmem:[#allocation5 + $0x18] sm:$0xff]
        %v271 = vadd.f32 %v263, %v267
        %v272 = vadd.f32 %v264, %v268
        %v273 = vadd.f32 %v265, %v269
        %v274 = vadd.f32 %v266, %v270
        %v275 = vld [vmem:[%s2] sm:$0x3]
        %v277 = vlaneseq
        %v278 = vshrl.u32 %v277, 7
        %v279 = vsub.s32 0, %v278
        %v280 = vrot.slane %v275, %v279
        %v281 = vlaneseq
        %v282 = vshrl.u32 %v281, 7
        %v283 = vsub.s32 1, %v282
        %v284 = vrot.slane %v275, %v283
        %v287 = vadd.f32 %v271, %v280
        %v288 = vadd.f32 %v272, %v284
        %v289 = vadd.f32 %v273, %v280
        %v290 = vadd.f32 %v274, %v284
        %v291 = vld [vmem:[%s3] sm:$0x3]
        %v292 = vld [vmem:[%s4] sm:$0x3]
        %v293 = vadd.f32 %v287, %v288
        %294 = vadd.xlane.f32.xlu0 %v293
        %v295 = vpop.xlane.xlu0 %294
        %v296 = vadd.f32 %v289, %v290
        %297 = vadd.xlane.f32.xlu0 %v296
        %v298 = vpop.xlane.xlu0 %297
        %v299 = vrcp.pop 256.0
        %v300 = vmul.f32 %v295, %v299
        %v301 = vmul.f32 %v298, %v299
        %v302 = vsub.f32 %v287, %v300
        %v303 = vsub.f32 %v288, %v300
        %v304 = vsub.f32 %v289, %v301
        %v305 = vsub.f32 %v290, %v301
        %v306 = vmul.f32 %v302, %v302
        %v307 = vmul.f32 %v303, %v303
        %v308 = vmul.f32 %v304, %v304
        %v309 = vmul.f32 %v305, %v305
        %v310 = vadd.f32 %v306, %v307
        %311 = vadd.xlane.f32.xlu0 %v310
        %v312 = vpop.xlane.xlu0 %311
        %v313 = vadd.f32 %v308, %v309
        %314 = vadd.xlane.f32.xlu0 %v313
        %v315 = vpop.xlane.xlu0 %314
        %v316 = vmul.f32 %v312, %v299
        %v317 = vmul.f32 %v315, %v299
        %v318 = vadd.f32 %v316, 1e-12
        %v319 = vadd.f32 %v317, 1e-12
        %v320 = vrsqrt.pop %v318
        %v321 = vrsqrt.pop %v319
        %v322 = vmul.f32 %v302, %v320
        %v323 = vmul.f32 %v303, %v320
        %v324 = vmul.f32 %v304, %v321
        %v325 = vmul.f32 %v305, %v321
        %v327 = vlaneseq
        %v328 = vshrl.u32 %v327, 7
        %v329 = vsub.s32 0, %v328
        %v330 = vrot.slane %v291, %v329
        %v331 = vlaneseq
        %v332 = vshrl.u32 %v331, 7
        %v333 = vsub.s32 1, %v332
        %v334 = vrot.slane %v291, %v333
        %v337 = vmul.f32 %v322, %v330
        %v338 = vmul.f32 %v323, %v334
        %v339 = vmul.f32 %v324, %v330
        %v340 = vmul.f32 %v325, %v334
        %v342 = vlaneseq
        %v343 = vshrl.u32 %v342, 7
        %v344 = vsub.s32 0, %v343
        %v345 = vrot.slane %v292, %v344
        %v346 = vlaneseq
        %v347 = vshrl.u32 %v346, 7
        %v348 = vsub.s32 1, %v347
        %v349 = vrot.slane %v292, %v348
        %v352 = vadd.f32 %v337, %v345
        %v353 = vadd.f32 %v338, %v349
        %v354 = vadd.f32 %v339, %v345
        %v355 = vadd.f32 %v340, %v349
        %v356 = vpack.c.bf16 %v354, %v352
        %v357 = vpack.c.bf16 %v355, %v353
        %v360 = vunpack.c.l.b16 %v356
        %v361 = vunpack.c.l.b16 %v357
        %v362 = vunpack.c.h.b16 %v356
        %v363 = vunpack.c.h.b16 %v357
        %v364 = vpack.c.b16 %v361, %v360
        %v365 = vpack.c.b16 %v363, %v362
        %368 = vst [vmem:[%s258] sm:$0xff] %v364
        %369 = vst [vmem:[%s258 + $0x8] sm:$0xff] %v365
        %s370 = sand.u32 %s141, 1
        %s371 = scalar_lea.sflag [#allocation4], %s370
        %s372 = sand.u32 %s141, 1
        %s373 = smul.addr %s372, 16
        %s374 = scalar_lea.vmem [#allocation7], %s373
        // Predicated region
        $region49: #{tpu_custom_call.1} parent=39 // pred_check
          %p375 = pneg %p151
        $region50: #{tpu_custom_call.1} parent=39 // pred_check_branch
          %377 = sbr.rel (%p375) target = $region52
        $region51: #{tpu_custom_call.1} parent=39 // pred_region
          %s378 = smul.u32 2, %s23
          %s380 = ssub.s32 256, 256
          %381 = vsyncadd %s371, %s380
          %s382 = smul.addr %s378, 2
          %s383 = smul.addr %s382, 64
          %s384 = scalar_lea.hbm %s5, %s383
          %s385 = sshll.u32 %s374, 4
          %s386 = int_to_ptr.vmem [resolvable:$true] %s385
          %391 = dma.vmem_to_hbm [thread:$0]  %s386, 256, %s384, %s371, 128, 128, 8
        $region52: #{tpu_custom_call.1} parent=39 // pred_fallthru
          _
      $region40: #{tpu_custom_call.1} parent=5 // pred_fallthru
        _
      %p392 = scmp.le.s32.totalorder 2, %s18
      // Predicated region
      $region53: #{tpu_custom_call.1} parent=5 // pred_check
        %p393 = pneg %p392
      $region54: #{tpu_custom_call.1} parent=5 // pred_check_branch
        %395 = sbr.rel (%p393) target = $region56
      $region55: #{tpu_custom_call.1} parent=5 // pred_region
        %s396 = ssub.s32 %s18, 2
        // Predicated region
        $region57: #{tpu_custom_call.1} parent=55 // pred_check
          %p397 = pneg %p157
        $region58: #{tpu_custom_call.1} parent=55 // pred_check_branch
          %399 = sbr.rel (%p397) target = $region60
        $region59: #{tpu_custom_call.1} parent=55 // pred_region
          %s400 = sand.u32 %s142, 1
          %s401 = scalar_lea.sflag [#allocation4], %s400
          %s402 = sand.u32 %s142, 1
          %s403 = smul.addr %s402, 16
          %s404 = scalar_lea.vmem [#allocation7], %s403
          %405 = dma.done %s401, 256
        $region60: #{tpu_custom_call.1} parent=55 // pred_fallthru
          _
      $region56: #{tpu_custom_call.1} parent=5 // pred_fallthru
        _
    $region6: #{tpu_custom_call.1} parent=1 // loop_footer
      %s22 = sadd.s32 1, %s18
    $region7: #{tpu_custom_call.1} parent=1 // loop_footer_branch
      %17 = sbr.rel target = $region3
    $region8: #{tpu_custom_call.1} parent=1 // loop_exit
      _
    %406 = vsyncpa [#allocation3], 1
    %s407 = scalar_lea.sflag [#allocation3], 1
    %408 = vsyncpa %s407, 1
    %409 = vsyncpa [#allocation6], 1
    %410 = vsyncpa [#allocation4], 1
    %s411 = scalar_lea.sflag [#allocation4], 1
    %412 = vsyncpa %s411, 1

</llo_original>
